<compile_context>
chip_gen: v7x
topology: tpu7x:2x2x1
jax: 0.10.0
libtpu: 0.0.40
codegen_flags: <defaults>
</compile_context>

<pallas_src>
import functools

import jax
import jax.numpy as jnp
from jax.experimental import pallas as pl
from jax.experimental.pallas import tpu as pltpu

LANE = 128
SUBLANE = 8
_TARGET_BLOCK_BYTES = 2 << 20   # ~2 MiB DMA block per streamed input
_MIN_TILE_ROWS = 512
_MAX_TILE_ROWS = 8192


def _cdiv(a, b):
    return -(-a // b)


def _round_up(a, b):
    return _cdiv(a, b) * b


def _num_tensorcores():
    """2 TensorCores per chip on v7x, 1 on v5e/v6e (review: make NCORES hw-aware)."""
    try:
        kind = jax.devices()[0].device_kind.lower()
    except Exception:
        return 1
    return 2 if ("v7" in kind or "tpu7" in kind) else 1


def _tpu_vmem_bytes():
    try:
        info = pltpu.get_tpu_info()
        v = getattr(info, "vmem_capacity_bytes", None)
        if v:
            return int(v)
    except Exception:
        pass
    return 64 << 20   # conservative (v7x per-TC physical VMEM)


def _vmem_estimate(tile_rows, itemsize):
    """Rough VMEM need: 5 double-buffered input streams + f32 temporaries."""
    block = tile_rows * LANE * itemsize
    pipeline = 2 * 5 * block                 # wmk blocks counted at img size (conservative)
    scratch = 6 * tile_rows * LANE * 4       # live f32 vector temporaries in the body
    return pipeline + scratch + (2 << 20)


def _tile_row_cap(itemsize, budget_bytes):
    cap = max(_TARGET_BLOCK_BYTES // (LANE * itemsize), _MIN_TILE_ROWS)
    cap = _round_up(min(cap, _MAX_TILE_ROWS), SUBLANE)
    while cap > _MIN_TILE_ROWS and _vmem_estimate(cap, itemsize) > budget_bytes:
        cap //= 2
    return max(cap, SUBLANE)


def _to_lane_slab(x):
    """Row-major flatten to a lane-dense (rows, 128) slab in the NATIVE dtype.

    Free (pure reshape) for contiguous inputs whose size is a multiple of 128;
    otherwise only the flat tail is zero-padded to the next lane boundary.
    Since every streamed tensor pair is padded identically with zeros, the
    padded lanes contribute 0 to every |diff| / diff^2 statistic."""
    flat = jnp.ravel(x)
    n = flat.size
    rows = max(_cdiv(n, LANE), 1)
    if rows * LANE != n:
        # TODO(synk): avoidable copy when upstream sizes are multiples of 128.
        flat = jnp.pad(flat, (0, rows * LANE - n))
    return flat.reshape(rows, LANE), rows


def _psum_8x128(x):
    """(T, 128) f32 -> (8, 128) partial sums.

    T % 8 == 0 (the streamed-tile case): pure VPU adds.
    Otherwise (tiny full-extent slab): one sublane reduction into row 0."""
    t = x.shape[0]
    if t % SUBLANE == 0:
        if t == SUBLANE:
            return x
        return jnp.sum(x.reshape(t // SUBLANE, SUBLANE, LANE), axis=0)
    s = jnp.sum(x, axis=0, keepdims=True)                       # (1, 128)
    return jnp.concatenate([s, jnp.zeros((SUBLANE - 1, LANE), jnp.float32)], axis=0)


def _partial_sums_kernel(wm_ref, orig_ref, rec_ref, rwm_ref, twm_ref, out_ref, *,
                         tiles_per_core,
                         img_rows, img_tile_rows, n_img_tiles,
                         wmk_rows, wmk_tile_rows, n_wmk_tiles):
    """Per-core output block out_ref: (4, 8, 128) f32 partial sums.

       row 0: sum((wm - orig)^2)     row 1: sum(|wm - orig|)
       row 2: sum(|rec_img - orig|)  row 3: sum(|rec_wmk - tgt_wmk|)
    """
    i = pl.program_id(1)
    tile_idx = pl.program_id(0) * tiles_per_core + i

    @pl.when(i == 0)
    def _init():
        out_ref[...] = jnp.zeros_like(out_ref)

    def gated(rows, tile_rows, n_tiles, accum):
        # rows / tile_rows / n_tiles are Python ints -> branches are static.
        ragged = (rows % tile_rows) != 0
        n_full = n_tiles - 1 if ragged else n_tiles
        if n_full > 0:
            @pl.when(tile_idx < n_full)
            def _():
                accum(None)                       # hot path: no mask ops at all
        if ragged:
            valid_rows = rows - (n_tiles - 1) * tile_rows     # static
            @pl.when(tile_idx == n_tiles - 1)
            def _():
                row = jax.lax.broadcasted_iota(jnp.int32, (tile_rows, LANE), 0)
                accum(row < valid_rows)
        # tile_idx >= n_tiles (duplicate tiles on the clamped index map on v7x)
        # fall through both branches and contribute nothing.

    def img_accum(mask):
        wm = wm_ref[...].astype(jnp.float32)
        orig = orig_ref[...].astype(jnp.float32)
        rec = rec_ref[...].astype(jnp.float32)
        d = wm - orig
        sq = d * d
        ab = jnp.abs(d)
        rc = jnp.abs(rec - orig)
        if mask is not None:
            zero = jnp.zeros((), jnp.float32)
            sq = jnp.where(mask, sq, zero)        # where (not *) so garbage NaN/Inf -> 0
            ab = jnp.where(mask, ab, zero)
            rc = jnp.where(mask, rc, zero)
        out_ref[0] += _psum_8x128(sq)
        out_ref[1] += _psum_8x128(ab)
        out_ref[2] += _psum_8x128(rc)

    def wmk_accum(mask):
        dw = jnp.abs(rwm_ref[...].astype(jnp.float32) - twm_ref[...].astype(jnp.float32))
        if mask is not None:
            dw = jnp.where(mask, dw, jnp.zeros((), jnp.float32))
        out_ref[3] += _psum_8x128(dw)

    gated(img_rows, img_tile_rows, n_img_tiles, img_accum)
    gated(wmk_rows, wmk_tile_rows, n_wmk_tiles, wmk_accum)


def watermark_loss(outputs, targets,
                   image_weight=1.0, robust_weight=100.0, fragile_weight=10.0):
    wm = outputs['watermarked_image']
    orig = targets['original_image']
    rec = outputs['recovered_image']
    rwm = outputs['recovered_watermark']
    twm = targets['target_watermark']
    dec = outputs['decoded_message']
    msg = targets['target_message']

    n_img = orig.size
    n_wmk = twm.size

    ncores = _num_tensorcores()
    phys_vmem = _tpu_vmem_bytes()
    itemsize = max(jnp.dtype(t.dtype).itemsize for t in (wm, orig, rec, rwm, twm))
    cap = _tile_row_cap(itemsize, int(0.6 * phys_vmem))

    # --- lane-dense slabs (no tile-granularity padding, native dtype) -------
    wm2, img_rows = _to_lane_slab(wm)
    orig2, _ = _to_lane_slab(orig)
    rec2, _ = _to_lane_slab(rec)
    rwm2, wmk_rows = _to_lane_slab(rwm)
    twm2, _ = _to_lane_slab(twm)

    # --- grid: (ncores, tiles_per_core); stream whichever slab needs more ---
    n_steps = max(_cdiv(img_rows, cap), _cdiv(wmk_rows, cap), 1)
    tiles_per_core = _cdiv(n_steps, ncores)
    total_tiles = ncores * tiles_per_core

    def tile_rows_for(rows):
        t = _round_up(_cdiv(rows, total_tiles), SUBLANE)
        return rows if t >= rows else t   # full-extent block for tiny slabs

    img_tile_rows = tile_rows_for(img_rows)
    wmk_tile_rows = tile_rows_for(wmk_rows)
    n_img_tiles = _cdiv(img_rows, img_tile_rows)
    n_wmk_tiles = _cdiv(wmk_rows, wmk_tile_rows)

    # Clamped index maps: duplicate grid steps (possible when the tile count
    # doesn't divide by ncores, or for the smaller watermark stream) re-map to
    # the last valid block; the kernel skips their accumulation.
    img_spec = pl.BlockSpec(
        (img_tile_rows, LANE),
        lambda c, i: (jnp.minimum(c * tiles_per_core + i, n_img_tiles - 1), 0))
    wmk_spec = pl.BlockSpec(
        (wmk_tile_rows, LANE),
        lambda c, i: (jnp.minimum(c * tiles_per_core + i, n_wmk_tiles - 1), 0))
    out_spec = pl.BlockSpec((None, 4, SUBLANE, LANE), lambda c, i: (c, 0, 0, 0))

    # --- VMEM budget / limit (generation-aware) ------------------------------
    est = (2 * (3 * img_tile_rows + 2 * wmk_tile_rows) * LANE * itemsize
           + 6 * img_tile_rows * LANE * 4 + (2 << 20))
    vmem_limit = int(min(max(est + (16 << 20), 32 << 20), int(0.9 * phys_vmem)))

    kernel = functools.partial(
        _partial_sums_kernel,
        tiles_per_core=tiles_per_core,
        img_rows=img_rows, img_tile_rows=img_tile_rows, n_img_tiles=n_img_tiles,
        wmk_rows=wmk_rows, wmk_tile_rows=wmk_tile_rows, n_wmk_tiles=n_wmk_tiles)

    out = pl.pallas_call(
        kernel,
        out_shape=jax.ShapeDtypeStruct((ncores, 4, SUBLANE, LANE), jnp.float32),
        grid_spec=pltpu.PrefetchScalarGridSpec(
            num_scalar_prefetch=0,
            grid=(ncores, tiles_per_core),
            in_specs=[img_spec, img_spec, img_spec, wmk_spec, wmk_spec],
            out_specs=out_spec,
        ),
        compiler_params=pltpu.CompilerParams(
            dimension_semantics=("parallel", "arbitrary"),
            vmem_limit_bytes=vmem_limit),
    )(wm2, orig2, rec2, rwm2, twm2)

    # --- tiny epilogue: cross-core/cross-lane sums + true-count means --------
    sums = jnp.sum(out, axis=(0, 2, 3))          # (4,)
    inv_img = 1.0 / float(n_img)
    mse = sums[0] * inv_img
    l1 = sums[1] * inv_img
    image_loss = mse + l1
    fragile_loss = sums[2] * inv_img + sums[3] / float(n_wmk)

    # Message losses are only B*L elements -> computed in plain JAX (fuses into
    # the epilogue, zero extra HBM traffic), per perf review.
    x = dec.astype(jnp.float32)
    y = msg.astype(jnp.float32)
    robust_loss = jnp.mean(jnp.maximum(x, 0.0) - x * y + jnp.log1p(jnp.exp(-jnp.abs(x))))
    bit_accuracy = jnp.mean(((x > 0.0) == (y > 0.5)).astype(jnp.float32))

    total_loss = (image_weight * image_loss
                  + robust_weight * robust_loss
                  + fragile_weight * fragile_loss)

    # On-device jnp scalars (no host syncs); callers can jit this function.
    # TODO(synk): PyTorch returns Python floats via .item(); kept on device here.
    loss_details = {
        'total_loss': total_loss,
        'image_loss': image_loss,
        'robust_loss': robust_loss,
        'fragile_loss': fragile_loss,
        'bit_accuracy': bit_accuracy,
    }
    return total_loss, loss_details


def _reference(outputs, targets, iw=1.0, rw=100.0, fw=10.0):
    """Pure-JAX reference mirroring the PyTorch module (sanity check)."""
    wm, orig = outputs['watermarked_image'], targets['original_image']
    image_loss = jnp.mean((wm - orig) ** 2) + jnp.mean(jnp.abs(wm - orig))
    x, y = outputs['decoded_message'], targets['target_message']
    robust_loss = jnp.mean(jnp.maximum(x, 0.) - x * y + jnp.log1p(jnp.exp(-jnp.abs(x))))
    fragile_loss = (jnp.mean(jnp.abs(outputs['recovered_image'] - orig))
                    + jnp.mean(jnp.abs(outputs['recovered_watermark']
                                       - targets['target_watermark'])))
    total = iw * image_loss + rw * robust_loss + fw * fragile_loss
    bit_acc = jnp.mean(((x > 0.0) == (y > 0.5)).astype(jnp.float32))
    return total, bit_acc


if __name__ == "__main__":
    key = jax.random.PRNGKey(0)
    ks = jax.random.split(key, 7)

    B, C, H, W = 2, 4, 16, 16      # image: NCHW
    WC = 1                         # watermark channels
    L = 32                         # message length

    original_image = jax.random.uniform(ks[0], (B, C, H, W), jnp.float32)
    watermarked_image = original_image + 0.05 * jax.random.normal(ks[1], (B, C, H, W), jnp.float32)
    recovered_image = original_image + 0.02 * jax.random.normal(ks[2], (B, C, H, W), jnp.float32)
    target_watermark = jax.random.uniform(ks[3], (B, WC, H, W), jnp.float32)
    recovered_watermark = target_watermark + 0.03 * jax.random.normal(ks[4], (B, WC, H, W), jnp.float32)
    decoded_message = 2.0 * jax.random.normal(ks[5], (B, L), jnp.float32)        # logits
    target_message = (jax.random.uniform(ks[6], (B, L), jnp.float32) > 0.5).astype(jnp.float32)

    outputs = {
        'watermarked_image': watermarked_image,
        'decoded_message': decoded_message,
        'recovered_image': recovered_image,
        'recovered_watermark': recovered_watermark,
    }
    targets = {
        'original_image': original_image,
        'target_message': target_message,
        'target_watermark': target_watermark,
    }

    total_loss, details = watermark_loss(outputs, targets)
    total_loss = jax.block_until_ready(total_loss)

    ref_total, ref_bits = _reference(outputs, targets)
    ref_total = float(ref_total)
    assert abs(float(total_loss) - ref_total) <= 1e-4 * max(1.0, abs(ref_total)), \
        (float(total_loss), ref_total)
    assert abs(float(details['bit_accuracy']) - float(ref_bits)) <= 1e-5, \
        (float(details['bit_accuracy']), float(ref_bits))

    print("KERNEL_OK")
</pallas_src>

<mosaic_0001>
module attributes {stable_mosaic.version = 11 : i64} {
  func.func @_partial_sums_kernel(%arg0: i32, %arg1: i32, %arg2: memref<16x128xf32, #tpu.memory_space<vmem>>, %arg3: memref<16x128xf32, #tpu.memory_space<vmem>>, %arg4: memref<16x128xf32, #tpu.memory_space<vmem>>, %arg5: memref<4x128xf32, #tpu.memory_space<vmem>>, %arg6: memref<4x128xf32, #tpu.memory_space<vmem>>, %arg7: memref<1x4x8x128xf32, #tpu.memory_space<vmem>>) attributes {dimension_semantics = [#tpu.dimension_semantics<parallel>, #tpu.dimension_semantics<arbitrary>], iteration_bounds = array<i64: 1, 1>, scalar_prefetch = 0 : i64, scratch_operands = 0 : i64, tpu.core_type = #tpu.core_type<tc>, window_params = [{transform_indices = @transform_0, window_bounds = array<i64: 16, 128>}, {transform_indices = @transform_1, window_bounds = array<i64: 16, 128>}, {transform_indices = @transform_2, window_bounds = array<i64: 16, 128>}, {transform_indices = @transform_3, window_bounds = array<i64: 4, 128>}, {transform_indices = @transform_4, window_bounds = array<i64: 4, 128>}, {transform_indices = @transform_5, window_bounds = array<i64: 1, 4, 8, 128>}]} {
    %c1_i32 = arith.constant 1 : i32
    %0 = arith.muli %arg0, %c1_i32 : i32
    %1 = arith.addi %0, %arg1 : i32
    %c0_i32 = arith.constant 0 : i32
    %2 = arith.cmpi eq, %arg1, %c0_i32 : i32
    %3 = arith.extui %2 : i1 to i32
    %c0_i32_0 = arith.constant 0 : i32
    %4 = arith.cmpi ne, %3, %c0_i32_0 : i32
    scf.if %4 {
      %cst = arith.constant 0.000000e+00 : f32
      %11 = vector.broadcast %cst : f32 to vector<4x8x128xf32>
      %c0 = arith.constant 0 : index
      %c0_5 = arith.constant 0 : index
      %c0_6 = arith.constant 0 : index
      %c0_7 = arith.constant 0 : index
      %12 = vector.load %arg7[%c0, %c0_5, %c0_6, %c0_7] : memref<1x4x8x128xf32, #tpu.memory_space<vmem>>, vector<1x4x8x128xf32>
      %13 = vector.shape_cast %12 : vector<1x4x8x128xf32> to vector<4x8x128xf32>
      %14 = vector.shape_cast %11 : vector<4x8x128xf32> to vector<1x4x8x128xf32>
      tpu.vector_store %arg7[%c0, %c0_5, %c0_6, %c0_7], %14 {strides = array<i32>} : memref<1x4x8x128xf32, #tpu.memory_space<vmem>>, vector<1x4x8x128xf32>,
    } else {
    }
    %c1_i32_1 = arith.constant 1 : i32
    %5 = arith.cmpi slt, %1, %c1_i32_1 : i32
    %6 = arith.extui %5 : i1 to i32
    %c0_i32_2 = arith.constant 0 : i32
    %7 = arith.cmpi ne, %6, %c0_i32_2 : i32
    scf.if %7 {
      %c0 = arith.constant 0 : index
      %c0_5 = arith.constant 0 : index
      %11 = vector.load %arg2[%c0, %c0_5] : memref<16x128xf32, #tpu.memory_space<vmem>>, vector<16x128xf32>
      %c0_6 = arith.constant 0 : index
      %c0_7 = arith.constant 0 : index
      %12 = vector.load %arg3[%c0_6, %c0_7] : memref<16x128xf32, #tpu.memory_space<vmem>>, vector<16x128xf32>
      %c0_8 = arith.constant 0 : index
      %c0_9 = arith.constant 0 : index
      %13 = vector.load %arg4[%c0_8, %c0_9] : memref<16x128xf32, #tpu.memory_space<vmem>>, vector<16x128xf32>
      %14 = arith.subf %11, %12 : vector<16x128xf32>
      %15 = arith.mulf %14, %14 : vector<16x128xf32>
      %16 = math.absf %14 : vector<16x128xf32>
      %17 = arith.subf %13, %12 : vector<16x128xf32>
      %18 = math.absf %17 : vector<16x128xf32>
      %c0_10 = arith.constant 0 : index
      %c0_11 = arith.constant 0 : index
      %c0_12 = arith.constant 0 : index
      %c0_13 = arith.constant 0 : index
      %19 = vector.load %arg7[%c0_10, %c0_11, %c0_12, %c0_13] : memref<1x4x8x128xf32, #tpu.memory_space<vmem>>, vector<1x1x8x128xf32>
      %20 = vector.shape_cast %19 : vector<1x1x8x128xf32> to vector<8x128xf32>
      %21 = vector.shape_cast %15 : vector<16x128xf32> to vector<2x8x128xf32>
      %cst = arith.constant dense<0.000000e+00> : vector<8x128xf32>
      %22 = vector.multi_reduction <add>, %21, %cst [0] : vector<2x8x128xf32> to vector<8x128xf32>
      %23 = arith.addf %20, %22 : vector<8x128xf32>
      %c0_14 = arith.constant 0 : index
      %c0_15 = arith.constant 0 : index
      %c0_16 = arith.constant 0 : index
      %c0_17 = arith.constant 0 : index
      %24 = vector.load %arg7[%c0_14, %c0_15, %c0_16, %c0_17] : memref<1x4x8x128xf32, #tpu.memory_space<vmem>>, vector<1x1x8x128xf32>
      %25 = vector.shape_cast %24 : vector<1x1x8x128xf32> to vector<8x128xf32>
      %26 = vector.shape_cast %23 : vector<8x128xf32> to vector<1x1x8x128xf32>
      tpu.vector_store %arg7[%c0_14, %c0_15, %c0_16, %c0_17], %26 {strides = array<i32>} : memref<1x4x8x128xf32, #tpu.memory_space<vmem>>, vector<1x1x8x128xf32>,
      %c0_18 = arith.constant 0 : index
      %c1 = arith.constant 1 : index
      %c0_19 = arith.constant 0 : index
      %c0_20 = arith.constant 0 : index
      %27 = vector.load %arg7[%c0_18, %c1, %c0_19, %c0_20] : memref<1x4x8x128xf32, #tpu.memory_space<vmem>>, vector<1x1x8x128xf32>
      %28 = vector.shape_cast %27 : vector<1x1x8x128xf32> to vector<8x128xf32>
      %29 = vector.shape_cast %16 : vector<16x128xf32> to vector<2x8x128xf32>
      %cst_21 = arith.constant dense<0.000000e+00> : vector<8x128xf32>
      %30 = vector.multi_reduction <add>, %29, %cst_21 [0] : vector<2x8x128xf32> to vector<8x128xf32>
      %31 = arith.addf %28, %30 : vector<8x128xf32>
      %c0_22 = arith.constant 0 : index
      %c1_23 = arith.constant 1 : index
      %c0_24 = arith.constant 0 : index
      %c0_25 = arith.constant 0 : index
      %32 = vector.load %arg7[%c0_22, %c1_23, %c0_24, %c0_25] : memref<1x4x8x128xf32, #tpu.memory_space<vmem>>, vector<1x1x8x128xf32>
      %33 = vector.shape_cast %32 : vector<1x1x8x128xf32> to vector<8x128xf32>
      %34 = vector.shape_cast %31 : vector<8x128xf32> to vector<1x1x8x128xf32>
      tpu.vector_store %arg7[%c0_22, %c1_23, %c0_24, %c0_25], %34 {strides = array<i32>} : memref<1x4x8x128xf32, #tpu.memory_space<vmem>>, vector<1x1x8x128xf32>,
      %c0_26 = arith.constant 0 : index
      %c2 = arith.constant 2 : index
      %c0_27 = arith.constant 0 : index
      %c0_28 = arith.constant 0 : index
      %35 = vector.load %arg7[%c0_26, %c2, %c0_27, %c0_28] : memref<1x4x8x128xf32, #tpu.memory_space<vmem>>, vector<1x1x8x128xf32>
      %36 = vector.shape_cast %35 : vector<1x1x8x128xf32> to vector<8x128xf32>
      %37 = vector.shape_cast %18 : vector<16x128xf32> to vector<2x8x128xf32>
      %cst_29 = arith.constant dense<0.000000e+00> : vector<8x128xf32>
      %38 = vector.multi_reduction <add>, %37, %cst_29 [0] : vector<2x8x128xf32> to vector<8x128xf32>
      %39 = arith.addf %36, %38 : vector<8x128xf32>
      %c0_30 = arith.constant 0 : index
      %c2_31 = arith.constant 2 : index
      %c0_32 = arith.constant 0 : index
      %c0_33 = arith.constant 0 : index
      %40 = vector.load %arg7[%c0_30, %c2_31, %c0_32, %c0_33] : memref<1x4x8x128xf32, #tpu.memory_space<vmem>>, vector<1x1x8x128xf32>
      %41 = vector.shape_cast %40 : vector<1x1x8x128xf32> to vector<8x128xf32>
      %42 = vector.shape_cast %39 : vector<8x128xf32> to vector<1x1x8x128xf32>
      tpu.vector_store %arg7[%c0_30, %c2_31, %c0_32, %c0_33], %42 {strides = array<i32>} : memref<1x4x8x128xf32, #tpu.memory_space<vmem>>, vector<1x1x8x128xf32>,
    } else {
    }
    %c1_i32_3 = arith.constant 1 : i32
    %8 = arith.cmpi slt, %1, %c1_i32_3 : i32
    %9 = arith.extui %8 : i1 to i32
    %c0_i32_4 = arith.constant 0 : i32
    %10 = arith.cmpi ne, %9, %c0_i32_4 : i32
    scf.if %10 {
      %c0 = arith.constant 0 : index
      %c0_5 = arith.constant 0 : index
      %11 = vector.load %arg5[%c0, %c0_5] : memref<4x128xf32, #tpu.memory_space<vmem>>, vector<4x128xf32>
      %c0_6 = arith.constant 0 : index
      %c0_7 = arith.constant 0 : index
      %12 = vector.load %arg6[%c0_6, %c0_7] : memref<4x128xf32, #tpu.memory_space<vmem>>, vector<4x128xf32>
      %13 = arith.subf %11, %12 : vector<4x128xf32>
      %14 = math.absf %13 : vector<4x128xf32>
      %c0_8 = arith.constant 0 : index
      %c3 = arith.constant 3 : index
      %c0_9 = arith.constant 0 : index
      %c0_10 = arith.constant 0 : index
      %15 = vector.load %arg7[%c0_8, %c3, %c0_9, %c0_10] : memref<1x4x8x128xf32, #tpu.memory_space<vmem>>, vector<1x1x8x128xf32>
      %16 = vector.shape_cast %15 : vector<1x1x8x128xf32> to vector<8x128xf32>
      %cst = arith.constant dense<0.000000e+00> : vector<128xf32>
      %17 = vector.multi_reduction <add>, %14, %cst [0] : vector<4x128xf32> to vector<128xf32>
      %18 = vector.shape_cast %17 : vector<128xf32> to vector<1x128xf32>
      %cst_11 = arith.constant 0.000000e+00 : f32
      %19 = vector.broadcast %cst_11 : f32 to vector<7x128xf32>
      %20 = tpu.concatenate %18, %19 in 0 : vector<1x128xf32>, vector<7x128xf32> -> vector<8x128xf32>
      %21 = arith.addf %16, %20 : vector<8x128xf32>
      %c0_12 = arith.constant 0 : index
      %c3_13 = arith.constant 3 : index
      %c0_14 = arith.constant 0 : index
      %c0_15 = arith.constant 0 : index
      %22 = vector.load %arg7[%c0_12, %c3_13, %c0_14, %c0_15] : memref<1x4x8x128xf32, #tpu.memory_space<vmem>>, vector<1x1x8x128xf32>
      %23 = vector.shape_cast %22 : vector<1x1x8x128xf32> to vector<8x128xf32>
      %24 = vector.shape_cast %21 : vector<8x128xf32> to vector<1x1x8x128xf32>
      tpu.vector_store %arg7[%c0_12, %c3_13, %c0_14, %c0_15], %24 {strides = array<i32>} : memref<1x4x8x128xf32, #tpu.memory_space<vmem>>, vector<1x1x8x128xf32>,
    } else {
    }
    return
  }
  func.func @transform_0(%arg0: i32, %arg1: i32) -> (i32, i32) {
    %c1_i32 = arith.constant 1 : i32
    %0 = arith.muli %arg0, %c1_i32 : i32
    %1 = arith.addi %0, %arg1 : i32
    %c0_i32 = arith.constant 0 : i32
    %2 = arith.minsi %1, %c0_i32 : i32
    %c0_i32_0 = arith.constant 0 : i32
    %c0_i32_1 = arith.constant 0 : i32
    return %2, %c0_i32_0 : i32, i32
  }
  func.func @transform_1(%arg0: i32, %arg1: i32) -> (i32, i32) {
    %c1_i32 = arith.constant 1 : i32
    %0 = arith.muli %arg0, %c1_i32 : i32
    %1 = arith.addi %0, %arg1 : i32
    %c0_i32 = arith.constant 0 : i32
    %2 = arith.minsi %1, %c0_i32 : i32
    %c0_i32_0 = arith.constant 0 : i32
    %c0_i32_1 = arith.constant 0 : i32
    return %2, %c0_i32_0 : i32, i32
  }
  func.func @transform_2(%arg0: i32, %arg1: i32) -> (i32, i32) {
    %c1_i32 = arith.constant 1 : i32
    %0 = arith.muli %arg0, %c1_i32 : i32
    %1 = arith.addi %0, %arg1 : i32
    %c0_i32 = arith.constant 0 : i32
    %2 = arith.minsi %1, %c0_i32 : i32
    %c0_i32_0 = arith.constant 0 : i32
    %c0_i32_1 = arith.constant 0 : i32
    return %2, %c0_i32_0 : i32, i32
  }
  func.func @transform_3(%arg0: i32, %arg1: i32) -> (i32, i32) {
    %c1_i32 = arith.constant 1 : i32
    %0 = arith.muli %arg0, %c1_i32 : i32
    %1 = arith.addi %0, %arg1 : i32
    %c0_i32 = arith.constant 0 : i32
    %2 = arith.minsi %1, %c0_i32 : i32
    %c0_i32_0 = arith.constant 0 : i32
    %c0_i32_1 = arith.constant 0 : i32
    return %2, %c0_i32_0 : i32, i32
  }
  func.func @transform_4(%arg0: i32, %arg1: i32) -> (i32, i32) {
    %c1_i32 = arith.constant 1 : i32
    %0 = arith.muli %arg0, %c1_i32 : i32
    %1 = arith.addi %0, %arg1 : i32
    %c0_i32 = arith.constant 0 : i32
    %2 = arith.minsi %1, %c0_i32 : i32
    %c0_i32_0 = arith.constant 0 : i32
    %c0_i32_1 = arith.constant 0 : i32
    return %2, %c0_i32_0 : i32, i32
  }
  func.func @transform_5(%arg0: i32, %arg1: i32) -> (i32, i32, i32, i32) {
    %c0_i32 = arith.constant 0 : i32
    %c0_i32_0 = arith.constant 0 : i32
    %c0_i32_1 = arith.constant 0 : i32
    %c0_i32_2 = arith.constant 0 : i32
    return %arg0, %c0_i32, %c0_i32_0, %c0_i32_1 : i32, i32, i32, i32
  }
}

</mosaic_0001>

<llo_original>
// kernel: tpu_custom_call.1
$region0: #{tpu_custom_call.1}
  #allocation0 [shape = 'u32[]', space=smem, size = 0x4, offset = 0x4, fixed_abs, tag = 'smem constant byte address 0x4 - core index']
  #allocation1 [shape = 'u32[144,128]{1,0:T(1,128)}', space=vmem, size = 0x12000, scoped, tag = 'internal scratch']
  %s0 = inlined_call_operand.hbm [shape: f32[16,128], index: 0, kind: input, shape index: {}]
  %s1 = inlined_call_operand.hbm [shape: f32[16,128], index: 1, kind: input, shape index: {}]
  %s2 = inlined_call_operand.hbm [shape: f32[16,128], index: 2, kind: input, shape index: {}]
  %s3 = inlined_call_operand.vmem [shape: f32[4,128], index: 3, kind: input, shape index: {}]
  %s4 = inlined_call_operand.vmem [shape: f32[4,128], index: 4, kind: input, shape index: {}]
  %s5 = inlined_call_operand.hbm [shape: f32[1,4,8,128], index: 5, kind: output, shape index: {}]
  %s6 = sld [smem:[#allocation0]]
  $region50: #{tpu_custom_call.1} parent=0
    _
  %s8 = ssub.s32 1, %s6
  %s9 = scalar_select 0, %s8, %s6
  $region1: #{tpu_custom_call.1} parent=0
    #allocation2 [shape = 'u8[8192]{0}', space=vmem, size = 0x2000, scoped, tag = 'input window, operand 0, single buffered']
    #allocation3 [shape = 's32[1]{0}', space=sflag, size = 0x4, scoped, tag = 'scoped memory for tpu_custom_call.1']
    #allocation4 [shape = 's32[1]{0}', space=sflag, size = 0x4, scoped, tag = 'scoped memory for tpu_custom_call.1']
    #allocation5 [shape = 'u8[8192]{0}', space=vmem, size = 0x2000, scoped, tag = 'input window, operand 1, single buffered']
    #allocation6 [shape = 's32[1]{0}', space=sflag, size = 0x4, scoped, tag = 'scoped memory for tpu_custom_call.1']
    #allocation7 [shape = 'u8[8192]{0}', space=vmem, size = 0x2000, scoped, tag = 'input window, operand 2, single buffered']
    #allocation8 [shape = 'u8[16384]{0}', space=vmem, size = 0x4000, scoped, tag = 'output window, operand 0, single buffered']
    %10 = vsyncpa [#allocation3], 0
    %11 = vsyncpa [#allocation6], 0
    %12 = vsyncpa [#allocation4], 0
    // Predicated region
    $region2: #{tpu_custom_call.1} parent=1 // pred_check
      _
    $region3: #{tpu_custom_call.1} parent=1 // pred_check_branch
      %14 = sbr.rel (0) target = $region5
    $region4: #{tpu_custom_call.1} parent=1 // pred_region
      %s15 = sadd.s32 0, 0
      %p16 = scmp.lt.s32.totalorder %s15, 0
      %s17 = scalar_select %p16, %s15, 0
      %s18 = smul.u32 2, %s17
      %s20 = ssub.s32 256, 256
      %21 = vsyncadd [#allocation3], %s20
      %s22 = smul.addr %s18, 128
      %s23 = scalar_lea.hbm %s0, %s22
      %s24 = sshll.u32 [#allocation2], 4
      %s25 = int_to_ptr.vmem [resolvable:$true] %s24
      %30 = dma.hbm_to_vmem [thread:$0]  %s23, 256, %s25, [#allocation3], 128, 128, 8
    $region5: #{tpu_custom_call.1} parent=1 // pred_fallthru
      _
    // Predicated region
    $region6: #{tpu_custom_call.1} parent=1 // pred_check
      _
    $region7: #{tpu_custom_call.1} parent=1 // pred_check_branch
      %32 = sbr.rel (0) target = $region9
    $region8: #{tpu_custom_call.1} parent=1 // pred_region
      %s33 = sadd.s32 0, 0
      %p34 = scmp.lt.s32.totalorder %s33, 0
      %s35 = scalar_select %p34, %s33, 0
      %s36 = smul.u32 2, %s35
      %s38 = ssub.s32 256, 256
      %39 = vsyncadd [#allocation6], %s38
      %s40 = smul.addr %s36, 128
      %s41 = scalar_lea.hbm %s1, %s40
      %s42 = sshll.u32 [#allocation5], 4
      %s43 = int_to_ptr.vmem [resolvable:$true] %s42
      %48 = dma.hbm_to_vmem [thread:$0]  %s41, 256, %s43, [#allocation6], 128, 128, 8
    $region9: #{tpu_custom_call.1} parent=1 // pred_fallthru
      _
    // Predicated region
    $region10: #{tpu_custom_call.1} parent=1 // pred_check
      _
    $region11: #{tpu_custom_call.1} parent=1 // pred_check_branch
      %50 = sbr.rel (0) target = $region13
    $region12: #{tpu_custom_call.1} parent=1 // pred_region
      %s51 = sadd.s32 0, 0
      %p52 = scmp.lt.s32.totalorder %s51, 0
      %s53 = scalar_select %p52, %s51, 0
      %s54 = smul.u32 2, %s53
      %s56 = ssub.s32 256, 256
      %57 = vsyncadd [#allocation6], %s56
      %s58 = smul.addr %s54, 128
      %s59 = scalar_lea.hbm %s2, %s58
      %s60 = sshll.u32 [#allocation7], 4
      %s61 = int_to_ptr.vmem [resolvable:$true] %s60
      %66 = dma.hbm_to_vmem [thread:$0]  %s59, 256, %s61, [#allocation6], 128, 128, 8
    $region13: #{tpu_custom_call.1} parent=1 // pred_fallthru
      _
    // Predicated region
    $region14: #{tpu_custom_call.1} parent=1 // pred_check
      _
    $region15: #{tpu_custom_call.1} parent=1 // pred_check_branch
      %68 = sbr.rel (0) target = $region17
    $region16: #{tpu_custom_call.1} parent=1 // pred_region
      %s69 = sadd.s32 0, 0
      %p70 = scmp.lt.s32.totalorder %s69, 0
      %s71 = scalar_select %p70, %s69, 0
      %p72 = scmp.lt.s32.totalorder %s71, 0
      %s73 = scalar_select %p72, %s71, 0
      %s74 = smul.addr %s73, 4
      %s75 = scalar_lea.vmem %s3, %s74
      %s76 = sadd.s32 0, 0
      %p77 = scmp.lt.s32.totalorder %s76, 0
      %s78 = scalar_select %p77, %s76, 0
    $region17: #{tpu_custom_call.1} parent=1 // pred_fallthru
      _
    // Predicated region
    $region18: #{tpu_custom_call.1} parent=1 // pred_check
      _
    $region19: #{tpu_custom_call.1} parent=1 // pred_check_branch
      %80 = sbr.rel (0) target = $region21
    $region20: #{tpu_custom_call.1} parent=1 // pred_region
      %s81 = sadd.s32 0, 0
      %p82 = scmp.lt.s32.totalorder %s81, 0
      %s83 = scalar_select %p82, %s81, 0
      %p84 = scmp.lt.s32.totalorder %s83, 0
      %s85 = scalar_select %p84, %s83, 0
      %s86 = smul.addr %s85, 4
      %s87 = scalar_lea.vmem %s4, %s86
      %s88 = sadd.s32 0, 0
      %p89 = scmp.lt.s32.totalorder %s88, 0
      %s90 = scalar_select %p89, %s88, 0
    $region21: #{tpu_custom_call.1} parent=1 // pred_fallthru
      _
    // Predicated region
    $region22: #{tpu_custom_call.1} parent=1 // pred_check
      _
    $region23: #{tpu_custom_call.1} parent=1 // pred_check_branch
      %92 = sbr.rel (0) target = $region25
    $region24: #{tpu_custom_call.1} parent=1 // pred_region
      %93 = dma.done [#allocation3], 256
    $region25: #{tpu_custom_call.1} parent=1 // pred_fallthru
      _
    // Predicated region
    $region26: #{tpu_custom_call.1} parent=1 // pred_check
      _
    $region27: #{tpu_custom_call.1} parent=1 // pred_check_branch
      %95 = sbr.rel (0) target = $region29
    $region28: #{tpu_custom_call.1} parent=1 // pred_region
      %96 = dma.done [#allocation6], 256
    $region29: #{tpu_custom_call.1} parent=1 // pred_fallthru
      _
    // Predicated region
    $region30: #{tpu_custom_call.1} parent=1 // pred_check
      _
    $region31: #{tpu_custom_call.1} parent=1 // pred_check_branch
      %98 = sbr.rel (0) target = $region33
    $region32: #{tpu_custom_call.1} parent=1 // pred_region
      %99 = dma.done [#allocation6], 256
    $region33: #{tpu_custom_call.1} parent=1 // pred_fallthru
      _
    %s100 = sadd.s32 0, 0
    %p101 = scmp.lt.s32.totalorder %s100, 0
    %s102 = scalar_select %p101, %s100, 0
    %p103 = scmp.lt.s32.totalorder %s102, 0
    %s104 = scalar_select %p103, %s102, 0
    %s105 = smul.addr %s104, 4
    %s106 = scalar_lea.vmem %s3, %s105
    %s107 = sadd.s32 0, 0
    %p108 = scmp.lt.s32.totalorder %s107, 0
    %s109 = scalar_select %p108, %s107, 0
    %p110 = scmp.lt.s32.totalorder %s109, 0
    %s111 = scalar_select %p110, %s109, 0
    %s112 = smul.addr %s111, 4
    %s113 = scalar_lea.vmem %s4, %s112
    %s114 = sadd.s32 0, 0
    %p115 = scmp.lt.s32.totalorder %s114, 0
    %s116 = scalar_select %p115, %s114, 0
    %s117 = smul.u32 2, %s116
    %s118 = sadd.s32 0, 0
    %p119 = scmp.lt.s32.totalorder %s118, 0
    %s120 = scalar_select %p119, %s118, 0
    %s121 = smul.u32 2, %s120
    %s122 = sadd.s32 0, 0
    %p123 = scmp.lt.s32.totalorder %s122, 0
    %s124 = scalar_select %p123, %s122, 0
    %s125 = smul.u32 2, %s124
    %s126 = sadd.s32 0, 0
    %p127 = scmp.lt.s32.totalorder %s126, 0
    %s128 = scalar_select %p127, %s126, 0
    %p129 = scmp.lt.s32.totalorder %s128, 0
    %s130 = scalar_select %p129, %s128, 0
    %s131 = smul.addr %s130, 4
    %s132 = scalar_lea.vmem %s3, %s131
    %s133 = sadd.s32 0, 0
    %p134 = scmp.lt.s32.totalorder %s133, 0
    %s135 = scalar_select %p134, %s133, 0
    %s136 = sadd.s32 0, 0
    %p137 = scmp.lt.s32.totalorder %s136, 0
    %s138 = scalar_select %p137, %s136, 0
    %p139 = scmp.lt.s32.totalorder %s138, 0
    %s140 = scalar_select %p139, %s138, 0
    %s141 = smul.addr %s140, 4
    %s142 = scalar_lea.vmem %s4, %s141
    %s143 = sadd.s32 0, 0
    %p144 = scmp.lt.s32.totalorder %s143, 0
    %s145 = scalar_select %p144, %s143, 0
    %s146 = sadd.s32 0, 0
    %p147 = scmp.eq.s32.totalorder 0, 0
    // Predicated region
    $region34: #{tpu_custom_call.1} parent=1 // pred_check
      %p148 = pneg %p147
    $region35: #{tpu_custom_call.1} parent=1 // pred_check_branch
      %150 = sbr.rel (%p148) target = $region37
    $region36: #{tpu_custom_call.1} parent=1 // pred_region
      %151 = vst [vmem:[#allocation8] sm:$0xff] 0.0
      %152 = vst [vmem:[#allocation8 + $0x8] sm:$0xff] 0.0
      %153 = vst [vmem:[#allocation8 + $0x10] sm:$0xff] 0.0
      %154 = vst [vmem:[#allocation8 + $0x18] sm:$0xff] 0.0
    $region37: #{tpu_custom_call.1} parent=1 // pred_fallthru
      _
    %p155 = scmp.lt.s32.totalorder %s146, 1
    // Predicated region
    $region38: #{tpu_custom_call.1} parent=1 // pred_check
      %p156 = pneg %p155
    $region39: #{tpu_custom_call.1} parent=1 // pred_check_branch
      %158 = sbr.rel (%p156) target = $region41
    $region40: #{tpu_custom_call.1} parent=1 // pred_region
      %v159 = vld [vmem:[#allocation2] sm:$0xff]
      %v160 = vld [vmem:[#allocation2 + $0x8] sm:$0xff]
      %v161 = vld [vmem:[#allocation5] sm:$0xff]
      %v162 = vld [vmem:[#allocation5 + $0x8] sm:$0xff]
      %v163 = vld [vmem:[#allocation7] sm:$0xff]
      %v164 = vld [vmem:[#allocation7 + $0x8] sm:$0xff]
      %v165 = vsub.f32 %v159, %v161
      %v166 = vsub.f32 %v160, %v162
      %v167 = vmul.f32 %v165, %v165
      %v168 = vmul.f32 %v166, %v166
      %v169 = vand.u32 2147483647, %v165
      %v170 = vand.u32 2147483647, %v166
      %v171 = vsub.f32 %v163, %v161
      %v172 = vsub.f32 %v164, %v162
      %v173 = vand.u32 2147483647, %v171
      %v174 = vand.u32 2147483647, %v172
      %v175 = vld [vmem:[#allocation8] sm:$0xff]
      %v176 = vadd.f32 %v167, %v168
      %v177 = vadd.f32 %v175, %v176
      %178 = vst [vmem:[#allocation8] sm:$0xff] %v177
      %s179 = scalar_lea.vmem [#allocation8], 8
      %v180 = vld [vmem:[%s179] sm:$0xff]
      %v181 = vadd.f32 %v169, %v170
      %v182 = vadd.f32 %v180, %v181
      %183 = vst [vmem:[%s179] sm:$0xff] %v182
      %s184 = scalar_lea.vmem [#allocation8], 16
      %v185 = vld [vmem:[%s184] sm:$0xff]
      %v186 = vadd.f32 %v173, %v174
      %v187 = vadd.f32 %v185, %v186
      %188 = vst [vmem:[%s184] sm:$0xff] %v187
      %v189 = vld [vmem:[%s132] sm:$0xf]
      %v190 = vld [vmem:[%s142] sm:$0xf]
      %v191 = vsub.f32 %v189, %v190
      %v192 = vand.u32 2147483647, %v191
      %s193 = scalar_lea.vmem [#allocation8], 24
      %v194 = vld [vmem:[%s193] sm:$0xff]
      %vm195 = vcmask 1043456
      %v196 = vsel %vm195, %v192, 0.0
      %v197 = vrot.slane %v196, 4
      %v198 = vadd.f32 %v196, %v197
      %v199 = vrot.slane %v198, 2
      %v200 = vadd.f32 %v198, %v199
      %v201 = vrot.slane %v200, 1
      %v202 = vadd.f32 %v200, %v201
      %vm203 = vcmask 1040384
      %v204 = vsel %vm203, %v202, 0.0
      %v205 = vadd.f32 %v194, %v204
      %206 = vst [vmem:[%s193] sm:$0xff] %v205
    $region41: #{tpu_custom_call.1} parent=1 // pred_fallthru
      _
    // Predicated region
    $region42: #{tpu_custom_call.1} parent=1 // pred_check
      _
    $region43: #{tpu_custom_call.1} parent=1 // pred_check_branch
      %208 = sbr.rel (0) target = $region45
    $region44: #{tpu_custom_call.1} parent=1 // pred_region
      %s210 = ssub.s32 512, 512
      %211 = vsyncadd [#allocation4], %s210
      %s212 = sshll.u32 [#allocation8], 4
      %s213 = int_to_ptr.vmem [resolvable:$true] %s212
      %218 = dma.vmem_to_hbm [thread:$0]  %s213, 512, %s5, [#allocation4], 128, 128, 8
    $region45: #{tpu_custom_call.1} parent=1 // pred_fallthru
      _
    // Predicated region
    $region46: #{tpu_custom_call.1} parent=1 // pred_check
      _
    $region47: #{tpu_custom_call.1} parent=1 // pred_check_branch
      %220 = sbr.rel (0) target = $region49
    $region48: #{tpu_custom_call.1} parent=1 // pred_region
      %221 = dma.done [#allocation4], 512
    $region49: #{tpu_custom_call.1} parent=1 // pred_fallthru
      _
    %222 = vsyncpa [#allocation3], 1
    %223 = vsyncpa [#allocation6], 1
    %224 = vsyncpa [#allocation4], 1

</llo_original>
